<compile_context>
chip_gen: v7x
topology: tpu7x:2x2x1
jax: 0.10.0
libtpu: 0.0.40
codegen_flags: <defaults>
</compile_context>

<pallas_src>
import math

import jax
import jax.numpy as jnp
from jax.experimental import pallas as pl
from jax.experimental.pallas import tpu as pltpu

_SQRT3 = math.sqrt(3.0)
_LANE = 128


def _round_up(x: int, m: int) -> int:
    return ((x + m - 1) // m) * m


def _sphere_l2_kernel(v_ref, o_ref):
    # v_ref: (3, TR, 128) native dtype; o_ref: (5, TR, 128) = degree-2 harmonics only.
    out_dtype = o_ref.dtype
    v = v_ref[...].astype(jnp.float32)   # f32 math in-register (v5e has no bf16 VPU math)
    x = v[0]
    y = v[1]
    z = v[2]
    o_ref[0, :, :] = (_SQRT3 * x * z).astype(out_dtype)
    o_ref[1, :, :] = (_SQRT3 * x * y).astype(out_dtype)
    o_ref[2, :, :] = (y * y - 0.5 * (x * x + z * z)).astype(out_dtype)
    o_ref[3, :, :] = (_SQRT3 * y * z).astype(out_dtype)
    o_ref[4, :, :] = (0.5 * _SQRT3 * (z * z - x * x)).astype(out_dtype)


def _choose_tile_rows(rows: int, max_tile_rows: int) -> int:
    """Tile-row policy: big tiles, no 8-step floor, >=2 balanced steps for large inputs."""
    cap = max(8, (max_tile_rows // 8) * 8)
    if rows <= 512 and rows <= cap:
        return rows                                   # single full-extent block
    n_steps = max(2, -(-rows // cap))                 # >= 2 balanced steps (v7x megacore)
    return min(cap, _round_up(-(-rows // n_steps), 8))


def sphere(edge_vec: jax.Array, lmax: int = 2, *, max_tile_rows: int = 2048) -> jax.Array:
    """Spherical harmonics of `edge_vec` (shape (..., 3)) up to degree `lmax`.

    Returns the PyTorch-layout result: (..., 3) for lmax=1 or (..., 8) for lmax=2.
    """
    if lmax not in (1, 2):
        raise ValueError(f"'lmax' needs to be 1 or 2 (got {lmax})")
    if edge_vec.shape[-1] != 3:
        raise ValueError("edge_vec must have last dim 3")

    if not jnp.issubdtype(edge_vec.dtype, jnp.floating):
        edge_vec = edge_vec.astype(jnp.float32)

    if lmax == 1:
        # sh_1 = (x, y, z) == the input itself; no kernel / extra HBM pass needed.
        return edge_vec

    lead_shape = edge_vec.shape[:-1]
    n = math.prod(lead_shape)
    dtype = edge_vec.dtype
    if n == 0:
        return jnp.zeros((*lead_shape, 8), dtype=dtype)

    # ---- Tiling: edges span (sublane, lane) as (rows, 128) --------------------------
    rows = -(-n // _LANE)                      # ceil(n / 128)
    tile_rows = _choose_tile_rows(rows, max_tile_rows)
    grid_len = -(-rows // tile_rows)
    rows_pad = grid_len * tile_rows
    n_pad = rows_pad * _LANE

    # ---- AoS -> SoA: one producer pass (transpose + pad fuse), native dtype ---------
    xt = edge_vec.reshape(n, 3).T                       # (3, n)
    if n_pad != n:
        xt = jnp.pad(xt, ((0, 0), (0, n_pad - n)))
    x3 = xt.reshape(3, rows_pad, _LANE)

    itemsize = jnp.dtype(dtype).itemsize
    cost = pl.CostEstimate(
        flops=10 * n_pad,
        transcendentals=0,
        bytes_accessed=(3 + 5) * n_pad * itemsize,
    )

    sh2_soa = pl.pallas_call(
        _sphere_l2_kernel,
        out_shape=jax.ShapeDtypeStruct((5, rows_pad, _LANE), dtype),
        grid_spec=pltpu.PrefetchScalarGridSpec(
            num_scalar_prefetch=0,
            grid=(grid_len,),
            in_specs=[pl.BlockSpec((3, tile_rows, _LANE), lambda i: (0, i, 0))],
            out_specs=pl.BlockSpec((5, tile_rows, _LANE), lambda i: (0, i, 0)),
        ),
        compiler_params=pltpu.CompilerParams(
            dimension_semantics=("parallel",),
            vmem_limit_bytes=32 * 1024 * 1024,   # big tiles also fit v5e's scoped VMEM
        ),
        cost_estimate=cost,
    )(x3)

    # ---- Consumer: one concat-root fusion producing the PyTorch (..., 8) layout -----
    # Degree-1 rows come straight from edge_vec (no pure-copy kernel stores); the
    # transpose+slice of the degree-2 SoA result fuses into the concatenate.
    sh1 = edge_vec.reshape(n, 3)
    sh2 = sh2_soa.reshape(5, n_pad)[:, :n].T            # (n, 5)
    out = jnp.concatenate([sh1, sh2], axis=-1)
    return out.reshape(*lead_shape, 8)


def _sphere_ref(edge_vec: jax.Array, lmax: int = 2) -> jax.Array:
    """Pure-JAX reference (mirrors the PyTorch forward)."""
    x = edge_vec[..., 0]
    y = edge_vec[..., 1]
    z = edge_vec[..., 2]
    if lmax == 1:
        return jnp.stack([x, y, z], axis=-1)
    sh_2_0 = _SQRT3 * x * z
    sh_2_1 = _SQRT3 * x * y
    sh_2_2 = y**2 - 0.5 * (x**2 + z**2)
    sh_2_3 = _SQRT3 * y * z
    sh_2_4 = (_SQRT3 / 2.0) * (z**2 - x**2)
    return jnp.stack([x, y, z, sh_2_0, sh_2_1, sh_2_2, sh_2_3, sh_2_4], axis=-1)


if __name__ == "__main__":
    root = jax.random.PRNGKey(0)
    k0, k1, k2 = jax.random.split(root, 3)

    # small example: 2 graphs x 8 edges of 3D vectors (single-tile, masked sublanes)
    edge_vec = jax.random.normal(k0, (2, 8, 3), dtype=jnp.float32)
    out = jax.block_until_ready(sphere(edge_vec, lmax=2))
    ref = _sphere_ref(edge_vec, lmax=2)
    assert out.shape == (2, 8, 8), out.shape
    assert jnp.allclose(out, ref, atol=1e-5, rtol=1e-5)

    # lmax=1 fast path (identity, no kernel)
    out1 = jax.block_until_ready(sphere(edge_vec, lmax=1))
    assert out1.shape == (2, 8, 3)
    assert jnp.allclose(out1, _sphere_ref(edge_vec, lmax=1), atol=1e-6)

    # multi-step + padding path (small tile cap forces a 3-step grid), f32
    ev2 = jax.random.normal(k1, (5000, 3), dtype=jnp.float32)
    out2 = jax.block_until_ready(sphere(ev2, lmax=2, max_tile_rows=16))
    assert out2.shape == (5000, 8)
    assert jnp.allclose(out2, _sphere_ref(ev2, lmax=2), atol=1e-5, rtol=1e-5)

    # default policy two-balanced-step path (rows > 512), f32
    ev3 = jax.random.normal(k2, (66_000, 3), dtype=jnp.float32)
    out3 = jax.block_until_ready(sphere(ev3, lmax=2))
    assert out3.shape == (66_000, 8)
    assert jnp.allclose(out3, _sphere_ref(ev3, lmax=2), atol=1e-5, rtol=1e-5)

    # native bf16 I/O path (kernel upcasts to f32 in-register, stores bf16)
    ev_bf16 = ev2.astype(jnp.bfloat16)
    out_bf16 = jax.block_until_ready(sphere(ev_bf16, lmax=2))
    assert out_bf16.dtype == jnp.bfloat16
    ref_bf16 = _sphere_ref(ev_bf16.astype(jnp.float32), lmax=2)
    assert jnp.allclose(out_bf16.astype(jnp.float32), ref_bf16, atol=5e-2, rtol=5e-2)

    print("KERNEL_OK")
</pallas_src>

<mosaic_0001>
module attributes {stable_mosaic.version = 11 : i64} {
  func.func @_sphere_l2_kernel(%arg0: i32, %arg1: memref<3x1x128xf32, #tpu.memory_space<vmem>>, %arg2: memref<5x1x128xf32, #tpu.memory_space<vmem>>) attributes {dimension_semantics = [#tpu.dimension_semantics<parallel>], iteration_bounds = array<i64: 1>, scalar_prefetch = 0 : i64, scratch_operands = 0 : i64, tpu.core_type = #tpu.core_type<tc>, window_params = [{transform_indices = @transform_0, window_bounds = array<i64: 3, 1, 128>}, {transform_indices = @transform_1, window_bounds = array<i64: 5, 1, 128>}]} {
    %c0 = arith.constant 0 : index
    %c0_0 = arith.constant 0 : index
    %c0_1 = arith.constant 0 : index
    %0 = vector.load %arg1[%c0, %c0_0, %c0_1] : memref<3x1x128xf32, #tpu.memory_space<vmem>>, vector<3x1x128xf32>
    %1 = vector.extract_strided_slice %0 {offsets = [0, 0, 0], sizes = [1, 1, 128], strides = [1, 1, 1]} : vector<3x1x128xf32> to vector<1x1x128xf32>
    %2 = vector.shape_cast %1 : vector<1x1x128xf32> to vector<1x128xf32>
    %3 = vector.extract_strided_slice %0 {offsets = [1, 0, 0], sizes = [1, 1, 128], strides = [1, 1, 1]} : vector<3x1x128xf32> to vector<1x1x128xf32>
    %4 = vector.shape_cast %3 : vector<1x1x128xf32> to vector<1x128xf32>
    %5 = vector.extract_strided_slice %0 {offsets = [2, 0, 0], sizes = [1, 1, 128], strides = [1, 1, 1]} : vector<3x1x128xf32> to vector<1x1x128xf32>
    %6 = vector.shape_cast %5 : vector<1x1x128xf32> to vector<1x128xf32>
    %cst = arith.constant 1.73205078 : f32
    %7 = vector.broadcast %cst : f32 to vector<1x128xf32>
    %8 = arith.mulf %7, %2 : vector<1x128xf32>
    %9 = arith.mulf %8, %6 : vector<1x128xf32>
    %c0_2 = arith.constant 0 : index
    %c0_3 = arith.constant 0 : index
    %c0_4 = arith.constant 0 : index
    %10 = vector.load %arg2[%c0_2, %c0_3, %c0_4] : memref<5x1x128xf32, #tpu.memory_space<vmem>>, vector<1x1x128xf32>
    %11 = vector.shape_cast %10 : vector<1x1x128xf32> to vector<1x128xf32>
    %12 = vector.shape_cast %9 : vector<1x128xf32> to vector<1x1x128xf32>
    tpu.vector_store %arg2[%c0_2, %c0_3, %c0_4], %12 {strides = array<i32>} : memref<5x1x128xf32, #tpu.memory_space<vmem>>, vector<1x1x128xf32>,
    %cst_5 = arith.constant 1.73205078 : f32
    %13 = vector.broadcast %cst_5 : f32 to vector<1x128xf32>
    %14 = arith.mulf %13, %2 : vector<1x128xf32>
    %15 = arith.mulf %14, %4 : vector<1x128xf32>
    %c1 = arith.constant 1 : index
    %c0_6 = arith.constant 0 : index
    %c0_7 = arith.constant 0 : index
    %16 = vector.load %arg2[%c1, %c0_6, %c0_7] : memref<5x1x128xf32, #tpu.memory_space<vmem>>, vector<1x1x128xf32>
    %17 = vector.shape_cast %16 : vector<1x1x128xf32> to vector<1x128xf32>
    %18 = vector.shape_cast %15 : vector<1x128xf32> to vector<1x1x128xf32>
    tpu.vector_store %arg2[%c1, %c0_6, %c0_7], %18 {strides = array<i32>} : memref<5x1x128xf32, #tpu.memory_space<vmem>>, vector<1x1x128xf32>,
    %19 = arith.mulf %4, %4 : vector<1x128xf32>
    %20 = arith.mulf %2, %2 : vector<1x128xf32>
    %21 = arith.mulf %6, %6 : vector<1x128xf32>
    %22 = arith.addf %20, %21 : vector<1x128xf32>
    %cst_8 = arith.constant 5.000000e-01 : f32
    %23 = vector.broadcast %cst_8 : f32 to vector<1x128xf32>
    %24 = arith.mulf %23, %22 : vector<1x128xf32>
    %25 = arith.subf %19, %24 : vector<1x128xf32>
    %c2 = arith.constant 2 : index
    %c0_9 = arith.constant 0 : index
    %c0_10 = arith.constant 0 : index
    %26 = vector.load %arg2[%c2, %c0_9, %c0_10] : memref<5x1x128xf32, #tpu.memory_space<vmem>>, vector<1x1x128xf32>
    %27 = vector.shape_cast %26 : vector<1x1x128xf32> to vector<1x128xf32>
    %28 = vector.shape_cast %25 : vector<1x128xf32> to vector<1x1x128xf32>
    tpu.vector_store %arg2[%c2, %c0_9, %c0_10], %28 {strides = array<i32>} : memref<5x1x128xf32, #tpu.memory_space<vmem>>, vector<1x1x128xf32>,
    %cst_11 = arith.constant 1.73205078 : f32
    %29 = vector.broadcast %cst_11 : f32 to vector<1x128xf32>
    %30 = arith.mulf %29, %4 : vector<1x128xf32>
    %31 = arith.mulf %30, %6 : vector<1x128xf32>
    %c3 = arith.constant 3 : index
    %c0_12 = arith.constant 0 : index
    %c0_13 = arith.constant 0 : index
    %32 = vector.load %arg2[%c3, %c0_12, %c0_13] : memref<5x1x128xf32, #tpu.memory_space<vmem>>, vector<1x1x128xf32>
    %33 = vector.shape_cast %32 : vector<1x1x128xf32> to vector<1x128xf32>
    %34 = vector.shape_cast %31 : vector<1x128xf32> to vector<1x1x128xf32>
    tpu.vector_store %arg2[%c3, %c0_12, %c0_13], %34 {strides = array<i32>} : memref<5x1x128xf32, #tpu.memory_space<vmem>>, vector<1x1x128xf32>,
    %35 = arith.mulf %6, %6 : vector<1x128xf32>
    %36 = arith.mulf %2, %2 : vector<1x128xf32>
    %37 = arith.subf %35, %36 : vector<1x128xf32>
    %cst_14 = arith.constant 0.866025388 : f32
    %38 = vector.broadcast %cst_14 : f32 to vector<1x128xf32>
    %39 = arith.mulf %38, %37 : vector<1x128xf32>
    %c4 = arith.constant 4 : index
    %c0_15 = arith.constant 0 : index
    %c0_16 = arith.constant 0 : index
    %40 = vector.load %arg2[%c4, %c0_15, %c0_16] : memref<5x1x128xf32, #tpu.memory_space<vmem>>, vector<1x1x128xf32>
    %41 = vector.shape_cast %40 : vector<1x1x128xf32> to vector<1x128xf32>
    %42 = vector.shape_cast %39 : vector<1x128xf32> to vector<1x1x128xf32>
    tpu.vector_store %arg2[%c4, %c0_15, %c0_16], %42 {strides = array<i32>} : memref<5x1x128xf32, #tpu.memory_space<vmem>>, vector<1x1x128xf32>,
    return
  }
  func.func @transform_0(%arg0: i32) -> (i32, i32, i32) {
    %c0_i32 = arith.constant 0 : i32
    %c0_i32_0 = arith.constant 0 : i32
    %c0_i32_1 = arith.constant 0 : i32
    return %c0_i32, %arg0, %c0_i32_0 : i32, i32, i32
  }
  func.func @transform_1(%arg0: i32) -> (i32, i32, i32) {
    %c0_i32 = arith.constant 0 : i32
    %c0_i32_0 = arith.constant 0 : i32
    %c0_i32_1 = arith.constant 0 : i32
    return %c0_i32, %arg0, %c0_i32_0 : i32, i32, i32
  }
}

</mosaic_0001>

<llo_original>
// kernel: tpu_custom_call.1
$region0: #{tpu_custom_call.1}
  #allocation0 [shape = 'u32[]', space=smem, size = 0x4, offset = 0x4, fixed_abs, tag = 'smem constant byte address 0x4 - core index']
  #allocation1 [shape = 'u32[144,128]{1,0:T(1,128)}', space=vmem, size = 0x12000, scoped, tag = 'internal scratch']
  %s0 = inlined_call_operand.hbm [shape: f32[3,1,128], index: 0, kind: input, shape index: {}]
  %s1 = inlined_call_operand.hbm [shape: f32[5,1,128], index: 1, kind: output, shape index: {}]
  %s2 = sld [smem:[#allocation0]]
  $region18: #{tpu_custom_call.1} parent=0
    _
  %s4 = ssub.s32 1, %s2
  %s5 = scalar_select 0, %s4, %s2
  $region1: #{tpu_custom_call.1} parent=0
    #allocation2 [shape = 'u8[1536]{0}', space=vmem, size = 0x800, scoped, tag = 'input window, operand 0, single buffered']
    #allocation3 [shape = 's32[1]{0}', space=sflag, size = 0x4, scoped, tag = 'scoped memory for tpu_custom_call.1']
    #allocation4 [shape = 's32[1]{0}', space=sflag, size = 0x4, scoped, tag = 'scoped memory for tpu_custom_call.1']
    #allocation5 [shape = 'u8[2560]{0}', space=vmem, size = 0xc00, scoped, tag = 'output window, operand 0, single buffered']
    %6 = vsyncpa [#allocation3], 0
    %7 = vsyncpa [#allocation4], 0
    // Predicated region
    $region2: #{tpu_custom_call.1} parent=1 // pred_check
      _
    $region3: #{tpu_custom_call.1} parent=1 // pred_check_branch
      %9 = sbr.rel (0) target = $region5
    $region4: #{tpu_custom_call.1} parent=1 // pred_region
      %s11 = ssub.s32 48, 48
      %12 = vsyncadd [#allocation3], %s11
      %s13 = sshll.u32 [#allocation2], 4
      %s14 = int_to_ptr.vmem [resolvable:$true] %s13
      %19 = dma.hbm_to_vmem [thread:$0]  %s0, 48, %s14, [#allocation3], 16, 16, 1
    $region5: #{tpu_custom_call.1} parent=1 // pred_fallthru
      _
    // Predicated region
    $region6: #{tpu_custom_call.1} parent=1 // pred_check
      _
    $region7: #{tpu_custom_call.1} parent=1 // pred_check_branch
      %21 = sbr.rel (0) target = $region9
    $region8: #{tpu_custom_call.1} parent=1 // pred_region
      %22 = dma.done [#allocation3], 48
    $region9: #{tpu_custom_call.1} parent=1 // pred_fallthru
      _
    %v23 = vld [vmem:[#allocation2] sm:$0x1]
    %v24 = vld [vmem:[#allocation2 + $0x1] sm:$0x1]
    %v25 = vld [vmem:[#allocation2 + $0x2] sm:$0x1]
    %v26 = vmul.f32 %v23, 1.7320508
    %v27 = vmul.f32 %v26, %v25
    %28 = vst [vmem:[#allocation5] sm:$0x1] %v27
    %v29 = vmul.f32 %v26, %v24
    %s30 = scalar_lea.vmem [#allocation5], 1
    %31 = vst [vmem:[%s30] sm:$0x1] %v29
    %v32 = vmul.f32 %v24, %v24
    %v33 = vmul.f32 %v23, %v23
    %v34 = vmul.f32 %v25, %v25
    %v35 = vadd.f32 %v33, %v34
    %v36 = vmul.f32 %v35, 0.5
    %v37 = vsub.f32 %v32, %v36
    %s38 = scalar_lea.vmem [#allocation5], 2
    %39 = vst [vmem:[%s38] sm:$0x1] %v37
    %v40 = vmul.f32 %v24, 1.7320508
    %v41 = vmul.f32 %v40, %v25
    %s42 = scalar_lea.vmem [#allocation5], 3
    %43 = vst [vmem:[%s42] sm:$0x1] %v41
    %v44 = vsub.f32 %v34, %v33
    %v45 = vmul.f32 %v44, 0.8660254
    %s46 = scalar_lea.vmem [#allocation5], 4
    %47 = vst [vmem:[%s46] sm:$0x1] %v45
    // Predicated region
    $region10: #{tpu_custom_call.1} parent=1 // pred_check
      _
    $region11: #{tpu_custom_call.1} parent=1 // pred_check_branch
      %49 = sbr.rel (0) target = $region13
    $region12: #{tpu_custom_call.1} parent=1 // pred_region
      %s51 = ssub.s32 80, 80
      %52 = vsyncadd [#allocation4], %s51
      %s53 = sshll.u32 [#allocation5], 4
      %s54 = int_to_ptr.vmem [resolvable:$true] %s53
      %59 = dma.vmem_to_hbm [thread:$0]  %s54, 80, %s1, [#allocation4], 16, 16, 1
    $region13: #{tpu_custom_call.1} parent=1 // pred_fallthru
      _
    // Predicated region
    $region14: #{tpu_custom_call.1} parent=1 // pred_check
      _
    $region15: #{tpu_custom_call.1} parent=1 // pred_check_branch
      %61 = sbr.rel (0) target = $region17
    $region16: #{tpu_custom_call.1} parent=1 // pred_region
      %62 = dma.done [#allocation4], 80
    $region17: #{tpu_custom_call.1} parent=1 // pred_fallthru
      _
    %63 = vsyncpa [#allocation3], 1
    %64 = vsyncpa [#allocation4], 1

</llo_original>
